<compile_context>
chip_gen: v6e
topology: v6e:2x2x1
jax: 0.10.0
libtpu: 0.0.40
codegen_flags: <defaults>
</compile_context>

<pallas_src>
import numpy as np
import jax
import jax.numpy as jnp
from jax.experimental import pallas as pl
from jax.experimental.pallas import tpu as pltpu


def _ceil_to(x, m):
    return (x + m - 1) // m * m


def _pad_to(a, shape):
    pads = [(0, s - d) for d, s in zip(a.shape, shape)]
    return jnp.pad(a, pads)


def _pick_vmem_limit():
    """~75% of physical VMEM: ~48 MiB on v7x (64 MiB), 96 MiB cap on v5e/v6e (128 MiB)."""
    default = 48 * 1024 * 1024
    try:
        cap = int(pltpu.get_tpu_info().vmem_capacity_bytes)
    except Exception:
        return default
    return max(32 * 1024 * 1024, min(cap * 3 // 4, 96 * 1024 * 1024))


def cfg_kernel(scale_ref, w_ref, x_ref, temb_ref, cemb_ref, o_ref):
    """One (sample b, lane tile n) block per grid step.

    scale_ref : SMEM (B,)      f32   per-sample guidance scale
    w_ref     : VMEM (Dp, Dp)  bf16  shared inner-model weight (resident; constant index)
    x_ref     : VMEM (Dp, TN)  bf16  input motion tile, lanes = frames
    temb_ref  : VMEM (Dp, 1)   f32   per-sample timestep embedding (lane-broadcast)
    cemb_ref  : VMEM (Dp, 1)   f32   per-sample text-condition embedding (lane-broadcast)
    o_ref     : VMEM (Dp, TN)  f32   CFG-combined output tile
    """
    b = pl.program_id(0)

    # bf16 operands, f32 accumulation on the MXU.
    base = jnp.dot(w_ref[...], x_ref[...], preferred_element_type=jnp.float32)
    base = base + temb_ref[...]                  # (Dp, TN) + (Dp, 1): lane broadcast

    out_uncond = jnp.tanh(base)                  # model(x, t, y_uncond)
    out = jnp.tanh(base + cemb_ref[...])         # model(x, t, y)

    # out_uncond + scale.view(-1,1,1,1) * (out - out_uncond)
    s = scale_ref[b]
    o_ref[...] = out_uncond + s * (out - out_uncond)


def classifier_free_sample(x, timesteps, y, w, c_proj, t_proj, *, max_lane_tile=512):
    """x: [B, njoints, nfeats, nframes] float32
       timesteps: [B] int32
       y: dict with 'scale' [B] float32 and 'text_emb' [B, E] float32
    """
    B, J, F, T = x.shape
    D = J * F

    # --- plain-JAX glue: tiny per-sample embeddings of the synthetic inner model ---
    t_feat = timesteps.astype(jnp.float32)[:, None] * jnp.array(
        [[1.0, 0.1, 0.01, 0.001]], dtype=jnp.float32)
    t_emb = t_feat @ t_proj                              # [B, D]
    c_emb = y["text_emb"].astype(jnp.float32) @ c_proj   # [B, D]
    scale = y["scale"].astype(jnp.float32)               # [B]

    # --- native layout: [B, D, T]; frames already minor -> no transposes anywhere ---
    x_bdt = x.reshape(B, D, T)

    # --- padding: sublanes to x16 (bf16 packing), lanes to a multiple of the lane tile ---
    Dp = _ceil_to(D, 16)
    TN = min(max_lane_tile, _ceil_to(T, 128))    # lane tile (>=128, <=max_lane_tile)
    Tp = _ceil_to(T, TN)                         # lane extent divides evenly by TN

    x_p = _pad_to(x_bdt, (B, Dp, Tp)).astype(jnp.bfloat16)     # bf16 MXU feed (fused w/ pad)
    w_p = _pad_to(w, (Dp, Dp)).astype(jnp.bfloat16)            # bf16 MXU feed
    t_p = _pad_to(t_emb, (B, Dp))[:, :, None]                  # [B, Dp, 1] f32 (compact)
    c_p = _pad_to(c_emb, (B, Dp))[:, :, None]                  # [B, Dp, 1] f32 (compact)

    grid = (B, Tp // TN)

    # Advisory cost estimate (matmul + 2x tanh per output element; real HBM bytes).
    flops = 2 * B * Dp * Dp * Tp + 6 * B * Dp * Tp
    transcendentals = 2 * B * Dp * Tp
    bytes_accessed = (B * Dp * Tp * 2          # x (bf16)
                      + B * Dp * Tp * 4        # out (f32)
                      + Dp * Dp * 2            # W (bf16)
                      + 2 * B * Dp * 4         # t_emb + c_emb
                      + B * 4)                 # scale

    out_p = pl.pallas_call(
        cfg_kernel,
        out_shape=jax.ShapeDtypeStruct((B, Dp, Tp), jnp.float32),
        grid_spec=pltpu.PrefetchScalarGridSpec(
            num_scalar_prefetch=0,
            grid=grid,
            in_specs=[
                pl.BlockSpec(memory_space=pltpu.MemorySpace.SMEM),       # scale [B] -> SMEM
                pl.BlockSpec((Dp, Dp), lambda b, n: (0, 0)),             # W (resident)
                pl.BlockSpec((None, Dp, TN), lambda b, n: (b, 0, n)),    # x tile
                pl.BlockSpec((None, Dp, 1), lambda b, n: (b, 0, 0)),     # t_emb column
                pl.BlockSpec((None, Dp, 1), lambda b, n: (b, 0, 0)),     # c_emb column
            ],
            out_specs=pl.BlockSpec((None, Dp, TN), lambda b, n: (b, 0, n)),
        ),
        compiler_params=pltpu.CompilerParams(
            dimension_semantics=("parallel", "parallel"),
            vmem_limit_bytes=_pick_vmem_limit(),
        ),
        cost_estimate=pl.CostEstimate(
            flops=int(flops),
            transcendentals=int(transcendentals),
            bytes_accessed=int(bytes_accessed),
        ),
    )(scale, w_p, x_p, t_p, c_p)

    # Strip padding; reshapes along the existing axis order are free.
    return out_p[:, :D, :T].reshape(B, J, F, T)


def reference(x, timesteps, y, w, c_proj, t_proj):
    """Pure-JAX reference of the same semantics (same bf16 MXU feed, f32 accumulate)."""
    B, J, F, T = x.shape
    D = J * F
    x_flat = x.reshape(B, D, T)
    t_feat = timesteps.astype(jnp.float32)[:, None] * jnp.array(
        [[1.0, 0.1, 0.01, 0.001]], dtype=jnp.float32)
    t_emb = (t_feat @ t_proj)[:, :, None]
    c_emb = (y["text_emb"].astype(jnp.float32) @ c_proj)[:, :, None]

    base = jnp.einsum(
        "de,bet->bdt",
        w.astype(jnp.bfloat16), x_flat.astype(jnp.bfloat16),
        preferred_element_type=jnp.float32) + t_emb
    out = jnp.tanh(base + c_emb)            # model(x, t, y)
    out_uncond = jnp.tanh(base)             # model(x, t, y_uncond)
    scale = y["scale"].reshape(-1, 1, 1, 1)
    res = out_uncond.reshape(B, J, F, T) + scale * (out - out_uncond).reshape(B, J, F, T)
    return res


# TODO(synk): the 'gazehoi_stage0_flag*' dataset branches additionally return a
# `flag` from the inner model; only the generic (else) branch is implemented here.

if __name__ == "__main__":
    key = jax.random.PRNGKey(0)
    B, J, F, T = 2, 4, 8, 16        # batch, njoints, nfeats, nframes
    D = J * F
    E = 32                          # "text" embedding width

    kx, kt, kc, kw, kcp, ktp, ks = jax.random.split(key, 7)
    x = jax.random.normal(kx, (B, J, F, T), dtype=jnp.float32)
    timesteps = jax.random.randint(kt, (B,), 0, 1000).astype(jnp.int32)
    y = {
        "text_emb": jax.random.normal(kc, (B, E), dtype=jnp.float32),
        "scale": jnp.array([2.5, 7.5], dtype=jnp.float32),
    }

    # Deterministic synthetic inner-model parameters.
    w = jax.random.normal(kw, (D, D), dtype=jnp.float32) * (1.0 / np.sqrt(D))
    c_proj = jax.random.normal(kcp, (E, D), dtype=jnp.float32) * (1.0 / np.sqrt(E))
    t_proj = jax.random.normal(ktp, (4, D), dtype=jnp.float32) * 0.5

    out = classifier_free_sample(x, timesteps, y, w, c_proj, t_proj)
    out = jax.block_until_ready(out)

    ref = jax.block_until_ready(reference(x, timesteps, y, w, c_proj, t_proj))
    assert out.shape == (B, J, F, T)
    # bf16 MXU operands (f32 accumulation) in both kernel and reference; only
    # accumulation order differs -> tight-but-safe tolerance.
    np.testing.assert_allclose(np.asarray(out), np.asarray(ref), rtol=1e-3, atol=1e-3)

    print("KERNEL_OK")
</pallas_src>

<mosaic_0001>
module attributes {stable_mosaic.version = 11 : i64} {
  func.func @cfg_kernel(%arg0: i32, %arg1: i32, %arg2: memref<2xf32, #tpu.memory_space<smem>>, %arg3: memref<32x32xbf16, #tpu.memory_space<vmem>>, %arg4: memref<1x32x128xbf16, #tpu.memory_space<vmem>>, %arg5: memref<1x32x1xf32, #tpu.memory_space<vmem>>, %arg6: memref<1x32x1xf32, #tpu.memory_space<vmem>>, %arg7: memref<1x32x128xf32, #tpu.memory_space<vmem>>) attributes {dimension_semantics = [#tpu.dimension_semantics<parallel>, #tpu.dimension_semantics<parallel>], iteration_bounds = array<i64: 2, 1>, scalar_prefetch = 0 : i64, scratch_operands = 0 : i64, tpu.core_type = #tpu.core_type<tc>, window_params = [{transform_indices = @transform_0, window_bounds = array<i64: 2>}, {pipeline_mode = #tpu.pipeline_mode<synchronous>, transform_indices = @transform_1, window_bounds = array<i64: 32, 32>}, {transform_indices = @transform_2, window_bounds = array<i64: 1, 32, 128>}, {transform_indices = @transform_3, window_bounds = array<i64: 1, 32, 1>}, {transform_indices = @transform_4, window_bounds = array<i64: 1, 32, 1>}, {transform_indices = @transform_5, window_bounds = array<i64: 1, 32, 128>}]} {
    %c0 = arith.constant 0 : index
    %c0_0 = arith.constant 0 : index
    %0 = vector.load %arg3[%c0, %c0_0] : memref<32x32xbf16, #tpu.memory_space<vmem>>, vector<32x32xbf16>
    %c0_1 = arith.constant 0 : index
    %c0_2 = arith.constant 0 : index
    %c0_3 = arith.constant 0 : index
    %1 = vector.load %arg4[%c0_1, %c0_2, %c0_3] : memref<1x32x128xbf16, #tpu.memory_space<vmem>>, vector<1x32x128xbf16>
    %2 = vector.shape_cast %1 : vector<1x32x128xbf16> to vector<32x128xbf16>
    %cst = arith.constant dense<0.000000e+00> : vector<32x128xf32>
    %3 = tpu.matmul %0, %2, %cst {dimension_numbers = #tpu.dot_dimension_numbers<[1], [0], [0], [1], [0, 0, 1, 1], [], []>} : vector<32x32xbf16>, vector<32x128xbf16>, vector<32x128xf32> -> vector<32x128xf32>
    %c0_4 = arith.constant 0 : index
    %c0_5 = arith.constant 0 : index
    %c0_6 = arith.constant 0 : index
    %4 = vector.load %arg5[%c0_4, %c0_5, %c0_6] : memref<1x32x1xf32, #tpu.memory_space<vmem>>, vector<1x32x1xf32>
    %5 = vector.shape_cast %4 : vector<1x32x1xf32> to vector<32x1xf32>
    %6 = vector.broadcast %5 : vector<32x1xf32> to vector<32x128xf32>
    %7 = arith.addf %3, %6 : vector<32x128xf32>
    %8 = math.tanh %7 : vector<32x128xf32>
    %c0_7 = arith.constant 0 : index
    %c0_8 = arith.constant 0 : index
    %c0_9 = arith.constant 0 : index
    %9 = vector.load %arg6[%c0_7, %c0_8, %c0_9] : memref<1x32x1xf32, #tpu.memory_space<vmem>>, vector<1x32x1xf32>
    %10 = vector.shape_cast %9 : vector<1x32x1xf32> to vector<32x1xf32>
    %11 = vector.broadcast %10 : vector<32x1xf32> to vector<32x128xf32>
    %12 = arith.addf %7, %11 : vector<32x128xf32>
    %13 = math.tanh %12 : vector<32x128xf32>
    %14 = arith.index_cast %arg0 : i32 to index
    %15 = memref.load %arg2[%14] : memref<2xf32, #tpu.memory_space<smem>>
    %16 = arith.subf %13, %8 : vector<32x128xf32>
    %17 = vector.broadcast %15 : f32 to vector<32x128xf32>
    %18 = arith.mulf %17, %16 : vector<32x128xf32>
    %19 = arith.addf %8, %18 : vector<32x128xf32>
    %c0_10 = arith.constant 0 : index
    %c0_11 = arith.constant 0 : index
    %c0_12 = arith.constant 0 : index
    %20 = vector.load %arg7[%c0_10, %c0_11, %c0_12] : memref<1x32x128xf32, #tpu.memory_space<vmem>>, vector<1x32x128xf32>
    %21 = vector.shape_cast %20 : vector<1x32x128xf32> to vector<32x128xf32>
    %22 = vector.shape_cast %19 : vector<32x128xf32> to vector<1x32x128xf32>
    tpu.vector_store %arg7[%c0_10, %c0_11, %c0_12], %22 {strides = array<i32>} : memref<1x32x128xf32, #tpu.memory_space<vmem>>, vector<1x32x128xf32>,
    return
  }
  func.func @transform_0(%arg0: i32, %arg1: i32) -> i32 {
    %c0_i32 = arith.constant 0 : i32
    %c0_i32_0 = arith.constant 0 : i32
    return %c0_i32 : i32
  }
  func.func @transform_1(%arg0: i32, %arg1: i32) -> (i32, i32) {
    %c0_i32 = arith.constant 0 : i32
    %c0_i32_0 = arith.constant 0 : i32
    %c0_i32_1 = arith.constant 0 : i32
    return %c0_i32, %c0_i32_0 : i32, i32
  }
  func.func @transform_2(%arg0: i32, %arg1: i32) -> (i32, i32, i32) {
    %c0_i32 = arith.constant 0 : i32
    %c0_i32_0 = arith.constant 0 : i32
    return %arg0, %c0_i32, %arg1 : i32, i32, i32
  }
  func.func @transform_3(%arg0: i32, %arg1: i32) -> (i32, i32, i32) {
    %c0_i32 = arith.constant 0 : i32
    %c0_i32_0 = arith.constant 0 : i32
    %c0_i32_1 = arith.constant 0 : i32
    return %arg0, %c0_i32, %c0_i32_0 : i32, i32, i32
  }
  func.func @transform_4(%arg0: i32, %arg1: i32) -> (i32, i32, i32) {
    %c0_i32 = arith.constant 0 : i32
    %c0_i32_0 = arith.constant 0 : i32
    %c0_i32_1 = arith.constant 0 : i32
    return %arg0, %c0_i32, %c0_i32_0 : i32, i32, i32
  }
  func.func @transform_5(%arg0: i32, %arg1: i32) -> (i32, i32, i32) {
    %c0_i32 = arith.constant 0 : i32
    %c0_i32_0 = arith.constant 0 : i32
    return %arg0, %c0_i32, %arg1 : i32, i32, i32
  }
}

</mosaic_0001>

<llo_original>
// kernel: tpu_custom_call.1
$region0: #{tpu_custom_call.1}
  #allocation0 [shape = 'u32[]', space=smem, size = 0x4, offset = 0x4, fixed_abs, tag = 'smem constant byte address 0x4 - core index']
  #allocation1 [shape = 'u32[144,128]{1,0:T(1,128)}', space=vmem, size = 0x12000, scoped, tag = 'internal scratch']
  %s0 = inlined_call_operand.vmem [shape: f32[2], index: 0, kind: input, shape index: {}]
  %s1 = inlined_call_operand.vmem [shape: bf16[32,32], index: 1, kind: input, shape index: {}]
  %s2 = inlined_call_operand.vmem [shape: bf16[2,32,128], index: 2, kind: input, shape index: {}]
  %s3 = inlined_call_operand.vmem [shape: f32[2,32,1], index: 3, kind: input, shape index: {}]
  %s4 = inlined_call_operand.vmem [shape: f32[2,32,1], index: 4, kind: input, shape index: {}]
  %s5 = inlined_call_operand.hbm [shape: f32[2,32,128], index: 5, kind: output, shape index: {}]
  %s6 = sld [smem:[#allocation0]]
  $region57: #{tpu_custom_call.1} parent=0
    _
  %s8 = ssub.s32 1, %s6
  %s9 = scalar_select 0, %s8, %s6
  $region1: #{tpu_custom_call.1} parent=0
    #allocation2 [shape = 'u8[512]{0}', space=smem, size = 0x200, scoped, tag = 'input window, operand 0, single buffered']
    #allocation3 [shape = 's32[2]{0}', space=sflag, size = 0x8, scoped, tag = 'scoped memory for tpu_custom_call.1']
    #allocation4 [shape = 's32[2]{0}', space=sflag, size = 0x8, scoped, tag = 'scoped memory for tpu_custom_call.1']
    #allocation5 [shape = 'u8[32768]{0}', space=vmem, size = 0x8000, scoped, tag = 'output window, operand 0']
    %10 = vsyncpa [#allocation4], 0
    %11 = vsyncpa [#allocation3], 0
    %s12 = scalar_lea.sflag [#allocation3], 1
    %13 = vsyncpa %s12, 0
    loop: start=0, step=1, limit=4
    $region2: #{tpu_custom_call.1} parent=1 // loop_pre_header
      _
    $region3: #{tpu_custom_call.1} parent=1 // loop_header
      %s15 = sphi 0, %s19
      %p16 = scmp.ge.s32.totalorder %s15, 4
      %s22 = sphi 0, %s34
      %s23 = sphi 0, %s30
      %s24 = sphi 0, %s22
      %s25 = sphi 0, %s23
      %s26 = sphi 0, %s24
      %s27 = sphi 0, %s25
      %s35 = sphi 0, %s35
      %s37 = sphi 0, %s35
      %s38 = sphi 0, %s37
      %s52 = sphi 0, %s38
      %s56 = sphi 0, %s56
      %s58 = sphi 0, %s56
      %s59 = sphi 0, %s58
      %s73 = sphi 0, %s59
      %s81 = sphi 0, %s83
      %s84 = sphi 0, %s81
      %s85 = sphi 0, %s84
      %s101 = sphi 0, %s85
      %s107 = sphi 0, %s109
      %s110 = sphi 0, %s107
      %s111 = sphi 0, %s110
      %s127 = sphi 0, %s111
      %s133 = sphi 0, %s135
      %s136 = sphi 0, %s133
      %s137 = sphi 0, %s136
      %s153 = sphi 0, %s137
      %s161 = sphi 0, %s163
      %s164 = sphi 0, %s161
      %s165 = sphi 0, %s164
      %s181 = sphi 0, %s165
    $region4: #{tpu_custom_call.1} parent=1 // loop_header_branch
      %18 = sbr.rel (%p16) target = $region8
    $region5: #{tpu_custom_call.1} parent=1 // loop_body
      %s20 = ssub.s32 %s15, 1
      %s21 = ssub.s32 %s15, 2
      %s28 = sadd.s32 1, %s23
      %p29 = scmp.ge.s32.totalorder %s28, 1
      %s30 = scalar_select %p29, 0, %s28
      %s31 = sadd.s32 1, %s22
      %s32 = scalar_select %p29, %s31, %s22
      %p33 = scmp.ge.s32.totalorder %s32, 2
      %s34 = scalar_select %p33, 0, %s32
      %s36 = sadd.s32 %s35, 1
      %p39 = scmp.eq.s32.totalorder %s15, 1
      %p40 = scmp.ne.s32.totalorder %s35, %s37
      %p41 = scmp.eq.s32.totalorder %s15, 0
      %p42 = por %p40, %p41
      %p43 = scmp.ne.s32.totalorder %s35, %s37
      %p44 = scmp.eq.s32.totalorder %s20, 1
      %p45 = por %p43, %p44
      %p46 = scmp.ne.s32.totalorder %s37, %s38
      %p47 = scmp.eq.s32.totalorder %s20, 0
      %p48 = por %p46, %p47
      %p49 = scmp.ne.s32.totalorder %s37, %s38
      %p50 = scmp.eq.s32.totalorder %s21, 1
      %p51 = por %p49, %p50
      %p53 = scmp.ne.s32.totalorder %s38, %s52
      %p54 = scmp.eq.s32.totalorder %s21, 0
      %p55 = por %p53, %p54
      %s57 = sadd.s32 %s56, 1
      %p60 = scmp.eq.s32.totalorder %s15, 1
      %p61 = scmp.ne.s32.totalorder %s56, %s58
      %p62 = scmp.eq.s32.totalorder %s15, 0
      %p63 = por %p61, %p62
      %p64 = scmp.ne.s32.totalorder %s56, %s58
      %p65 = scmp.eq.s32.totalorder %s20, 1
      %p66 = por %p64, %p65
      %p67 = scmp.ne.s32.totalorder %s58, %s59
      %p68 = scmp.eq.s32.totalorder %s20, 0
      %p69 = por %p67, %p68
      %p70 = scmp.ne.s32.totalorder %s58, %s59
      %p71 = scmp.eq.s32.totalorder %s21, 1
      %p72 = por %p70, %p71
      %p74 = scmp.ne.s32.totalorder %s59, %s73
      %p75 = scmp.eq.s32.totalorder %s21, 0
      %p76 = por %p74, %p75
      %s77 = ssub.s32 %s22, %s34
      %s78 = ssub.s32 %s23, %s30
      %s79 = sor.u32 %s77, %s78
      %p80 = scmp.eq.s32.totalorder %s79, 0
      %s82 = sadd.s32 %s81, 1
      %s83 = scalar_select %p80, %s81, %s82
      %p86 = pneg %p80
      %p87 = scmp.eq.s32.totalorder %s15, 1
      %p88 = por %p86, %p87
      %p89 = scmp.ne.s32.totalorder %s81, %s84
      %p90 = scmp.eq.s32.totalorder %s15, 0
      %p91 = por %p89, %p90
      %p92 = scmp.ne.s32.totalorder %s81, %s84
      %p93 = scmp.eq.s32.totalorder %s20, 1
      %p94 = por %p92, %p93
      %p95 = scmp.ne.s32.totalorder %s84, %s85
      %p96 = scmp.eq.s32.totalorder %s20, 0
      %p97 = por %p95, %p96
      %p98 = scmp.ne.s32.totalorder %s84, %s85
      %p99 = scmp.eq.s32.totalorder %s21, 1
      %p100 = por %p98, %p99
      %p102 = scmp.ne.s32.totalorder %s85, %s101
      %p103 = scmp.eq.s32.totalorder %s21, 0
      %p104 = por %p102, %p103
      %s105 = ssub.s32 %s22, %s34
      %p106 = scmp.eq.s32.totalorder %s105, 0
      %s108 = sadd.s32 %s107, 1
      %s109 = scalar_select %p106, %s107, %s108
      %p112 = pneg %p106
      %p113 = scmp.eq.s32.totalorder %s15, 1
      %p114 = por %p112, %p113
      %p115 = scmp.ne.s32.totalorder %s107, %s110
      %p116 = scmp.eq.s32.totalorder %s15, 0
      %p117 = por %p115, %p116
      %p118 = scmp.ne.s32.totalorder %s107, %s110
      %p119 = scmp.eq.s32.totalorder %s20, 1
      %p120 = por %p118, %p119
      %p121 = scmp.ne.s32.totalorder %s110, %s111
      %p122 = scmp.eq.s32.totalorder %s20, 0
      %p123 = por %p121, %p122
      %p124 = scmp.ne.s32.totalorder %s110, %s111
      %p125 = scmp.eq.s32.totalorder %s21, 1
      %p126 = por %p124, %p125
      %p128 = scmp.ne.s32.totalorder %s111, %s127
      %p129 = scmp.eq.s32.totalorder %s21, 0
      %p130 = por %p128, %p129
      %s131 = ssub.s32 %s22, %s34
      %p132 = scmp.eq.s32.totalorder %s131, 0
      %s134 = sadd.s32 %s133, 1
      %s135 = scalar_select %p132, %s133, %s134
      %p138 = pneg %p132
      %p139 = scmp.eq.s32.totalorder %s15, 1
      %p140 = por %p138, %p139
      %p141 = scmp.ne.s32.totalorder %s133, %s136
      %p142 = scmp.eq.s32.totalorder %s15, 0
      %p143 = por %p141, %p142
      %p144 = scmp.ne.s32.totalorder %s133, %s136
      %p145 = scmp.eq.s32.totalorder %s20, 1
      %p146 = por %p144, %p145
      %p147 = scmp.ne.s32.totalorder %s136, %s137
      %p148 = scmp.eq.s32.totalorder %s20, 0
      %p149 = por %p147, %p148
      %p150 = scmp.ne.s32.totalorder %s136, %s137
      %p151 = scmp.eq.s32.totalorder %s21, 1
      %p152 = por %p150, %p151
      %p154 = scmp.ne.s32.totalorder %s137, %s153
      %p155 = scmp.eq.s32.totalorder %s21, 0
      %p156 = por %p154, %p155
      %s157 = ssub.s32 %s22, %s34
      %s158 = ssub.s32 %s23, %s30
      %s159 = sor.u32 %s157, %s158
      %p160 = scmp.eq.s32.totalorder %s159, 0
      %s162 = sadd.s32 %s161, 1
      %s163 = scalar_select %p160, %s161, %s162
      %p166 = pneg %p160
      %p167 = scmp.eq.s32.totalorder %s15, 1
      %p168 = por %p166, %p167
      %p169 = scmp.ne.s32.totalorder %s161, %s164
      %p170 = scmp.eq.s32.totalorder %s15, 0
      %p171 = por %p169, %p170
      %p172 = scmp.ne.s32.totalorder %s161, %s164
      %p173 = scmp.eq.s32.totalorder %s20, 1
      %p174 = por %p172, %p173
      %p175 = scmp.ne.s32.totalorder %s164, %s165
      %p176 = scmp.eq.s32.totalorder %s20, 0
      %p177 = por %p175, %p176
      %p178 = scmp.ne.s32.totalorder %s164, %s165
      %p179 = scmp.eq.s32.totalorder %s21, 1
      %p180 = por %p178, %p179
      %p182 = scmp.ne.s32.totalorder %s165, %s181
      %p183 = scmp.eq.s32.totalorder %s21, 0
      %p184 = por %p182, %p183
      %p185 = scmp.le.s32.totalorder 1, %s15
      %p186 = scmp.lt.s32.totalorder %s15, 3
      %p187 = pnand %p185, %p186
      %p188 = pneg %p187
      // Predicated region
      $region9: #{tpu_custom_call.1} parent=5 // pred_check
        _
      $region10: #{tpu_custom_call.1} parent=5 // pred_check_branch
        %190 = sbr.rel (%p187) target = $region12
      $region11: #{tpu_custom_call.1} parent=5 // pred_region
        %s191 = ssub.s32 %s15, 1
        // Predicated region
        $region13: #{tpu_custom_call.1} parent=11 // pred_check
          %p192 = pneg %p48
        $region14: #{tpu_custom_call.1} parent=11 // pred_check_branch
          %194 = sbr.rel (%p192) target = $region16
        $region15: #{tpu_custom_call.1} parent=11 // pred_region
          %s196 = ssub.s32 16, 16
          %197 = vsyncadd [#allocation4], %s196
          %s199 = sshll.u32 %s0, 4
          %s200 = int_to_ptr.vmem [resolvable:$true] %s199
          %202 = dma.vmem_to_smem %s200, 16, [#allocation2], [#allocation4]
        $region16: #{tpu_custom_call.1} parent=11 // pred_fallthru
          _
        // Predicated region
        $region17: #{tpu_custom_call.1} parent=11 // pred_check
          %p203 = pneg %p69
        $region18: #{tpu_custom_call.1} parent=11 // pred_check_branch
          %205 = sbr.rel (%p203) target = $region20
        $region19: #{tpu_custom_call.1} parent=11 // pred_region
          _
        $region20: #{tpu_custom_call.1} parent=11 // pred_fallthru
          _
      $region12: #{tpu_custom_call.1} parent=5 // pred_fallthru
        _
      %p206 = scmp.lt.s32.totalorder %s15, 2
      // Predicated region
      $region21: #{tpu_custom_call.1} parent=5 // pred_check
        %p207 = pneg %p206
      $region22: #{tpu_custom_call.1} parent=5 // pred_check_branch
        %209 = sbr.rel (%p207) target = $region24
      $region23: #{tpu_custom_call.1} parent=5 // pred_region
        // Predicated region
        $region25: #{tpu_custom_call.1} parent=23 // pred_check
          %p210 = pneg %p91
        $region26: #{tpu_custom_call.1} parent=23 // pred_check_branch
          %212 = sbr.rel (%p210) target = $region28
        $region27: #{tpu_custom_call.1} parent=23 // pred_region
          %p213 = scmp.lt.s32.totalorder %s22, 1
          %s214 = scalar_select %p213, %s22, 1
          %p215 = scmp.lt.s32.totalorder %s23, 0
          %s216 = scalar_select %p215, %s23, 0
          %s217 = smul.addr %s214, 4
          %s218 = sadd.s32 %s216, %s217
          %s219 = smul.addr %s218, 4
          %s220 = scalar_lea.vmem %s2, %s219
        $region28: #{tpu_custom_call.1} parent=23 // pred_fallthru
          _
        // Predicated region
        $region29: #{tpu_custom_call.1} parent=23 // pred_check
          %p221 = pneg %p117
        $region30: #{tpu_custom_call.1} parent=23 // pred_check_branch
          %223 = sbr.rel (%p221) target = $region32
        $region31: #{tpu_custom_call.1} parent=23 // pred_region
          %p224 = scmp.lt.s32.totalorder %s22, 1
          %s225 = scalar_select %p224, %s22, 1
          %s226 = smul.addr %s225, 4
          %s227 = smul.addr %s226, 8
          %s228 = scalar_lea.vmem %s3, %s227
        $region32: #{tpu_custom_call.1} parent=23 // pred_fallthru
          _
        // Predicated region
        $region33: #{tpu_custom_call.1} parent=23 // pred_check
          %p229 = pneg %p143
        $region34: #{tpu_custom_call.1} parent=23 // pred_check_branch
          %231 = sbr.rel (%p229) target = $region36
        $region35: #{tpu_custom_call.1} parent=23 // pred_region
          %p232 = scmp.lt.s32.totalorder %s22, 1
          %s233 = scalar_select %p232, %s22, 1
          %s234 = smul.addr %s233, 4
          %s235 = smul.addr %s234, 8
          %s236 = scalar_lea.vmem %s4, %s235
        $region36: #{tpu_custom_call.1} parent=23 // pred_fallthru
          _
      $region24: #{tpu_custom_call.1} parent=5 // pred_fallthru
        _
      %p237 = scmp.le.s32.totalorder 1, %s15
      %p238 = scmp.lt.s32.totalorder %s15, 3
      %p239 = pnand %p237, %p238
      %p240 = pneg %p239
      // Predicated region
      $region37: #{tpu_custom_call.1} parent=5 // pred_check
        _
      $region38: #{tpu_custom_call.1} parent=5 // pred_check_branch
        %242 = sbr.rel (%p239) target = $region40
      $region39: #{tpu_custom_call.1} parent=5 // pred_region
        %s243 = ssub.s32 %s15, 1
        // Predicated region
        $region41: #{tpu_custom_call.1} parent=39 // pred_check
          %p244 = pneg %p48
        $region42: #{tpu_custom_call.1} parent=39 // pred_check_branch
          %246 = sbr.rel (%p244) target = $region44
        $region43: #{tpu_custom_call.1} parent=39 // pred_region
          %247 = dma.done [#allocation4], 16
        $region44: #{tpu_custom_call.1} parent=39 // pred_fallthru
          _
        %248 = sfence
        %p249 = pneg %p48
        %p250 = pneg %p45
        %p251 = pneg %p69
        %p252 = pneg %p66
        %p253 = scmp.lt.s32.totalorder %s24, 1
        %s254 = scalar_select %p253, %s24, 1
        %p255 = scmp.lt.s32.totalorder %s25, 0
        %s256 = scalar_select %p255, %s25, 0
        %s257 = smul.addr %s254, 4
        %s258 = sadd.s32 %s256, %s257
        %s259 = smul.addr %s258, 4
        %s260 = scalar_lea.vmem %s2, %s259
        %p261 = pneg %p97
        %p262 = pneg %p94
        %p263 = scmp.lt.s32.totalorder %s24, 1
        %s264 = scalar_select %p263, %s24, 1
        %s265 = smul.addr %s264, 4
        %s266 = smul.addr %s265, 8
        %s267 = scalar_lea.vmem %s3, %s266
        %p268 = pneg %p123
        %p269 = pneg %p120
        %p270 = scmp.lt.s32.totalorder %s24, 1
        %s271 = scalar_select %p270, %s24, 1
        %s272 = smul.addr %s271, 4
        %s273 = smul.addr %s272, 8
        %s274 = scalar_lea.vmem %s4, %s273
        %p275 = pneg %p149
        %p276 = pneg %p146
        %p277 = pneg %p177
        %p278 = pneg %p174
        %s279 = sand.u32 %s164, 1
        %s280 = scalar_lea.sflag [#allocation3], %s279
        %s281 = sand.u32 %s164, 1
        %s282 = smul.addr %s281, 32
        %s283 = scalar_lea.vmem [#allocation5], %s282
        %p284 = scmp.lt.s32.totalorder %s24, 1
        %s285 = scalar_select %p284, %s24, 1
        %p286 = scmp.lt.s32.totalorder %s25, 0
        %s287 = scalar_select %p286, %s25, 0
        %s288 = smul.addr %s285, 4
        %s289 = sadd.s32 %s287, %s288
        %s290 = smul.addr %s289, 4
        %s291 = scalar_lea.vmem %s2, %s290
        %p292 = scmp.lt.s32.totalorder %s24, 1
        %s293 = scalar_select %p292, %s24, 1
        %s294 = smul.addr %s293, 4
        %s295 = smul.addr %s294, 8
        %s296 = scalar_lea.vmem %s3, %s295
        %p297 = scmp.lt.s32.totalorder %s24, 1
        %s298 = scalar_select %p297, %s24, 1
        %s299 = smul.addr %s298, 4
        %s300 = smul.addr %s299, 8
        %s301 = scalar_lea.vmem %s4, %s300
        %v303 = vld [vmem:[%s1] sm:$0xf]
        %v304 = vld [vmem:[%s1 + $0x4] sm:$0xf]
        %v305 = vld [vmem:[%s1 + $0x8] sm:$0xf]
        %v306 = vld [vmem:[%s1 + $0xc] sm:$0xf]
        %v307 = vld [vmem:[%s291] sm:$0xf]
        %v308 = vld [vmem:[%s291 + $0x4] sm:$0xf]
        %v309 = vld [vmem:[%s291 + $0x8] sm:$0xf]
        %v310 = vld [vmem:[%s291 + $0xc] sm:$0xf]
        %v311 = vld [vmem:[%s296] sm:$0xff]
        %v312 = vld [vmem:[%s296 + $0x8] sm:$0xff]
        %v313 = vld [vmem:[%s296 + $0x10] sm:$0xff]
        %v314 = vld [vmem:[%s296 + $0x18] sm:$0xff]
        %316 = vset.pattern.permute.xlu0 0
        %317 = vperm.xlu0 %316, %v311
        %v318 = vpop.permute.xlu0 %317
        %321 = vset.pattern.permute.xlu0 0
        %322 = vperm.xlu0 %321, %v312
        %v323 = vpop.permute.xlu0 %322
        %326 = vset.pattern.permute.xlu0 0
        %327 = vperm.xlu0 %326, %v313
        %v328 = vpop.permute.xlu0 %327
        %331 = vset.pattern.permute.xlu0 0
        %332 = vperm.xlu0 %331, %v314
        %v333 = vpop.permute.xlu0 %332
        %v339 = vunpack.c.l.b16 %v303
        %v340 = vunpack.c.l.b16 %v304
        %v341 = vunpack.c.l.b16 %v305
        %v342 = vunpack.c.l.b16 %v306
        %v343 = vpack.c.b16 %v340, %v339
        %v344 = vpack.c.b16 %v342, %v341
        %v349 = vunpack.c.l.b16 %v307
        %v350 = vunpack.c.l.b16 %v308
        %v351 = vunpack.c.l.b16 %v309
        %v352 = vunpack.c.l.b16 %v310
        %v353 = vpack.c.b16 %v350, %v349
        %v354 = vpack.c.b16 %v352, %v351
        %vm357 = vcmask 261120
        %v359 = vsel %vm357, %v343, 0
        %v362 = vsel %vm357, %v344, 0
        %364 = vmatprep.subr.bf16.mxu0 0
        %365 = vmatpush1.bf16.msra.mxu0 0
        %366 = vmatprep.subr.bf16.mxu0 0
        %367 = vmatpush1.bf16.msra.mxu0 0
        %368 = vmatprep.subr.bf16.mxu0 0
        %369 = vmatpush1.bf16.msra.mxu0 0
        %370 = vmatprep.subr.bf16.mxu0 0
        %371 = vmatpush1.bf16.msra.mxu0 0
        %372 = vmatprep.subr.bf16.mxu0 0
        %373 = vmatpush1.bf16.msra.mxu0 0
        %374 = vmatprep.subr.bf16.mxu0 0
        %375 = vmatpush1.bf16.msra.mxu0 0
        %376 = vmatprep.subr.bf16.mxu0 0
        %377 = vmatpush1.bf16.msra.mxu0 %v354
        %378 = vmatprep.subr.bf16.mxu0 0
        %379 = vmatpush1.bf16.msra.mxu0 %v353
        %380 = vmatprep.subr.bf16.mxu0 0
        %381 = vmatpush2.bf16.msra.mxu0 0
        %382 = vmatprep.subr.bf16.mxu0 0
        %383 = vmatpush2.bf16.msra.mxu0 0
        %384 = vmatprep.subr.bf16.mxu0 0
        %385 = vmatpush2.bf16.msra.mxu0 0
        %386 = vmatprep.subr.bf16.mxu0 0
        %387 = vmatpush2.bf16.msra.mxu0 0
        %388 = vmatprep.subr.bf16.mxu0 0
        %389 = vmatpush2.bf16.msra.mxu0 0
        %390 = vmatprep.subr.bf16.mxu0 0
        %391 = vmatpush2.bf16.msra.mxu0 0
        %392 = vmatprep.subr.bf16.mxu0 0
        %393 = vmatpush2.bf16.msra.mxu0 0
        %394 = vmatprep.subr.bf16.mxu0 0
        %395 = vmatpush2.bf16.msra.mxu0 0
        %396 = vmatprep.mubr.bf16.mxu0 0
        %397 = vmatmul.mubr.bf16.gmra.mxu0 %v359
        %v398 = vpop.f32.mrf.mxu0
        %v399 = vadd.f32 %v318, %v398
        %v400 = vpop.f32.mrf.mxu0
        %v401 = vpop.f32.mrf.mxu0
        %v402 = vadd.f32 %v323, %v401
        %v403 = vpop.f32.mrf.mxu0
        %404 = vmatprep.mubr.bf16.mxu0 0
        %405 = vmatmul.mubr.bf16.gmra.mxu0 %v362
        %v406 = vpop.f32.mrf.mxu0
        %v407 = vadd.f32 %v328, %v406
        %v408 = vpop.f32.mrf.mxu0
        %v409 = vpop.f32.mrf.mxu0
        %v410 = vadd.f32 %v333, %v409
        %v411 = vpop.f32.mrf.mxu0
        %412 = vdwg.mxu0
        %v413 = vtanh.pop %v399
        %v414 = vtanh.pop %v402
        %v415 = vtanh.pop %v407
        %v416 = vtanh.pop %v410
        %v417 = vld [vmem:[%s301] sm:$0xff]
        %v418 = vld [vmem:[%s301 + $0x8] sm:$0xff]
        %v419 = vld [vmem:[%s301 + $0x10] sm:$0xff]
        %v420 = vld [vmem:[%s301 + $0x18] sm:$0xff]
        %422 = vset.pattern.permute.xlu0 0
        %423 = vperm.xlu0 %422, %v417
        %v424 = vpop.permute.xlu0 %423
        %427 = vset.pattern.permute.xlu0 0
        %428 = vperm.xlu0 %427, %v418
        %v429 = vpop.permute.xlu0 %428
        %432 = vset.pattern.permute.xlu0 0
        %433 = vperm.xlu0 %432, %v419
        %v434 = vpop.permute.xlu0 %433
        %437 = vset.pattern.permute.xlu0 0
        %438 = vperm.xlu0 %437, %v420
        %v439 = vpop.permute.xlu0 %438
        %v441 = vadd.f32 %v399, %v424
        %v442 = vadd.f32 %v402, %v429
        %v443 = vadd.f32 %v407, %v434
        %v444 = vadd.f32 %v410, %v439
        %v445 = vtanh.pop %v441
        %v446 = vtanh.pop %v442
        %v447 = vtanh.pop %v443
        %v448 = vtanh.pop %v444
        %s449 = sld [smem:[#allocation2 + %s24]]
        %v450 = vsub.f32 %v445, %v413
        %v451 = vsub.f32 %v446, %v414
        %v452 = vsub.f32 %v447, %v415
        %v453 = vsub.f32 %v448, %v416
        %v454 = vstv %s449
        %v455 = vmul.f32 %v454, %v450
        %v456 = vmul.f32 %v454, %v451
        %v457 = vmul.f32 %v454, %v452
        %v458 = vmul.f32 %v454, %v453
        %v459 = vadd.f32 %v413, %v455
        %v460 = vadd.f32 %v414, %v456
        %v461 = vadd.f32 %v415, %v457
        %v462 = vadd.f32 %v416, %v458
        %463 = vst [vmem:[%s283] sm:$0xff] %v459
        %464 = vst [vmem:[%s283 + $0x8] sm:$0xff] %v460
        %465 = vst [vmem:[%s283 + $0x10] sm:$0xff] %v461
        %466 = vst [vmem:[%s283 + $0x18] sm:$0xff] %v462
        %s467 = sand.u32 %s164, 1
        %s468 = scalar_lea.sflag [#allocation3], %s467
        %s469 = sand.u32 %s164, 1
        %s470 = smul.addr %s469, 32
        %s471 = scalar_lea.vmem [#allocation5], %s470
        // Predicated region
        $region45: #{tpu_custom_call.1} parent=39 // pred_check
          %p472 = pneg %p174
        $region46: #{tpu_custom_call.1} parent=39 // pred_check_branch
          %474 = sbr.rel (%p472) target = $region48
        $region47: #{tpu_custom_call.1} parent=39 // pred_region
          %s476 = ssub.s32 512, 512
          %477 = vsyncadd %s468, %s476
          %s478 = smul.addr %s24, 4
          %s479 = sadd.s32 %s25, %s478
          %s480 = smul.addr %s479, 128
          %s481 = scalar_lea.hbm %s5, %s480
          %s482 = sshll.u32 %s471, 4
          %s483 = int_to_ptr.vmem [resolvable:$true] %s482
          %488 = dma.vmem_to_hbm [thread:$0]  %s483, 512, %s481, %s468, 128, 128, 8
        $region48: #{tpu_custom_call.1} parent=39 // pred_fallthru
          _
      $region40: #{tpu_custom_call.1} parent=5 // pred_fallthru
        _
      %p489 = scmp.le.s32.totalorder 2, %s15
      // Predicated region
      $region49: #{tpu_custom_call.1} parent=5 // pred_check
        %p490 = pneg %p489
      $region50: #{tpu_custom_call.1} parent=5 // pred_check_branch
        %492 = sbr.rel (%p490) target = $region52
      $region51: #{tpu_custom_call.1} parent=5 // pred_region
        %s493 = ssub.s32 %s15, 2
        // Predicated region
        $region53: #{tpu_custom_call.1} parent=51 // pred_check
          %p494 = pneg %p180
        $region54: #{tpu_custom_call.1} parent=51 // pred_check_branch
          %496 = sbr.rel (%p494) target = $region56
        $region55: #{tpu_custom_call.1} parent=51 // pred_region
          %s497 = sand.u32 %s165, 1
          %s498 = scalar_lea.sflag [#allocation3], %s497
          %s499 = sand.u32 %s165, 1
          %s500 = smul.addr %s499, 32
          %s501 = scalar_lea.vmem [#allocation5], %s500
          %502 = dma.done %s498, 512
        $region56: #{tpu_custom_call.1} parent=51 // pred_fallthru
          _
      $region52: #{tpu_custom_call.1} parent=5 // pred_fallthru
        _
    $region6: #{tpu_custom_call.1} parent=1 // loop_footer
      %s19 = sadd.s32 1, %s15
    $region7: #{tpu_custom_call.1} parent=1 // loop_footer_branch
      %14 = sbr.rel target = $region3
    $region8: #{tpu_custom_call.1} parent=1 // loop_exit
      _
    %503 = vsyncpa [#allocation3], 1
    %s504 = scalar_lea.sflag [#allocation3], 1
    %505 = vsyncpa %s504, 1
    %506 = vsyncpa [#allocation4], 1
    %s507 = scalar_lea.sflag [#allocation4], 1
    %508 = vsyncpa %s507, 1

</llo_original>
